<compile_context>
chip_gen: v7x
topology: tpu7x:2x2x1
jax: 0.10.0
libtpu: 0.0.40
codegen_flags: <defaults>
</compile_context>

<pallas_src>
import math

import jax
import jax.numpy as jnp
from jax.experimental import pallas as pl
from jax.experimental.pallas import tpu as pltpu

_MIB = 1024 * 1024
_TM_ALIGNS = (256, 128, 64, 32, 16)   # row-tile alignments (coarsest first)
_TH_ALIGNS = (256, 128)               # hidden-slice alignments (lane multiples)


# ---------------------------------------------------------------------------
# Kernels
# ---------------------------------------------------------------------------
def _ffn_kernel_direct(x_ref, w1_ref, w3_ref, w2_ref, out_ref):
    """f32 output doubles as the accumulator (resident across the j axis)."""
    j = pl.program_id(1)

    @pl.when(j == 0)
    def _init():
        out_ref[...] = jnp.zeros_like(out_ref)

    xb = x_ref[...]                                                     # bf16
    h1 = jnp.dot(xb, w1_ref[...], preferred_element_type=jnp.float32)   # (TM, TH)
    h3 = jnp.dot(xb, w3_ref[...], preferred_element_type=jnp.float32)   # (TM, TH)
    gated = (jax.nn.silu(h1) * h3).astype(jnp.bfloat16)                 # (TM, TH)
    out_ref[...] += jnp.dot(gated, w2_ref[...],
                            preferred_element_type=jnp.float32)         # (TM, D)


def _ffn_kernel_scratch(x_ref, w1_ref, w3_ref, w2_ref, out_ref, acc_ref):
    """Non-f32 outputs: accumulate in a f32 scratch, cast at the last j step."""
    j = pl.program_id(1)

    @pl.when(j == 0)
    def _init():
        acc_ref[...] = jnp.zeros_like(acc_ref)

    xb = x_ref[...]                                                     # bf16
    h1 = jnp.dot(xb, w1_ref[...], preferred_element_type=jnp.float32)
    h3 = jnp.dot(xb, w3_ref[...], preferred_element_type=jnp.float32)
    gated = (jax.nn.silu(h1) * h3).astype(jnp.bfloat16)
    acc_ref[...] += jnp.dot(gated, w2_ref[...],
                            preferred_element_type=jnp.float32)

    @pl.when(j == pl.num_programs(1) - 1)
    def _finalize():
        out_ref[...] = acc_ref[...].astype(out_ref.dtype)


# ---------------------------------------------------------------------------
# Tile / VMEM selection helpers
# ---------------------------------------------------------------------------
def _vmem_capacity_bytes() -> int:
    try:
        return int(pltpu.get_tpu_info().vmem_capacity_bytes)
    except Exception:
        return 64 * _MIB  # conservative fallback (v7x per-TensorCore VMEM)


def _pick_tile(total: int, target: int, alignments) -> tuple[int, int]:
    """Return (tile, padded_total).

    Prefers the largest aligned divisor of `total` that is <= target (coarsest
    alignment first).  If none exists, pads `total` up to a multiple of an
    aligned tile (padded rows/columns are zeros and contribute nothing).
    """
    if total <= target:
        return total, total
    for align in alignments:
        t = (target // align) * align
        while t >= align:
            if total % t == 0:
                return t, total
            t -= align
    # No aligned divisor: pad.
    align = alignments[0]
    tile = max(alignments[-1], (target // align) * align)
    padded = ((total + tile - 1) // tile) * tile
    return tile, padded


def _working_set_bytes(tm, th, D, out_itemsize, use_scratch) -> int:
    x_b = 2 * tm * D * 2                      # bf16 x rows, double-buffered
    w_b = 2 * (2 * D * th + th * D) * 2       # w1, w3, w2 bf16 tiles, double-buffered
    out_b = 2 * tm * D * out_itemsize         # output tile, double-buffered
    acc_b = tm * D * 4 if use_scratch else 0  # f32 accumulator scratch
    return x_b + w_b + out_b + acc_b


# ---------------------------------------------------------------------------
# Wrapper
# ---------------------------------------------------------------------------
def ffn(x, w1, w2, w3, *, tm=None, th=None):
    """x: (..., D);  w1: (D, 4D);  w2: (4D, D);  w3: (D, 4D)  (in->out layout)."""
    *lead, D = x.shape
    M = math.prod(lead) if lead else 1
    H = w1.shape[1]
    assert w1.shape == (D, H) and w3.shape == (D, H) and w2.shape == (H, D)

    out_dtype = x.dtype
    direct = out_dtype == jnp.float32          # accumulate straight into out_ref
    out_itemsize = jnp.dtype(out_dtype).itemsize

    # Pre-cast activations & weights to bf16 (full-rate MXU, half the DMA bytes).
    bf16 = jnp.bfloat16
    x2 = x.reshape(M, D).astype(bf16)
    w1b, w2b, w3b = w1.astype(bf16), w2.astype(bf16), w3.astype(bf16)

    capacity = _vmem_capacity_bytes()
    budget = int(capacity * 0.78)              # ~50 MiB on v7x, ~100 MiB on v5e/v6e
    big_vmem = capacity >= 100 * _MIB

    if tm is None or th is None:
        # Roofline-driven targets: tm sets flop/byte on the streamed weights.
        tm_target = 1024 if big_vmem else 512
        th_target = 512 if big_vmem else 256
        # v7x-class chips have 2 TensorCores: keep >= 2 row tiles when M is big.
        if not big_vmem and M >= 512:
            tm_target = min(tm_target, max(256, (M // 2) // 256 * 256))
        while True:
            tm_a, Mp = _pick_tile(M, tm_target, _TM_ALIGNS)
            th_a, Hp = _pick_tile(H, th_target, _TH_ALIGNS)
            if _working_set_bytes(tm_a, th_a, D, out_itemsize, not direct) <= budget:
                break
            if th_target > 256:
                th_target //= 2
            elif tm_target > 256:
                tm_target //= 2
            else:
                break
        tm = tm if tm is not None else tm_a
        th = th if th is not None else th_a

    # Validate user-supplied tiles (sublane / lane constraints), pad to fit.
    assert tm == M or tm % 8 == 0, "tm must be a multiple of 8 (or equal M)"
    assert th == H or th % 128 == 0, "th must be a multiple of 128 (or equal H)"
    Mp = ((M + tm - 1) // tm) * tm
    Hp = ((H + th - 1) // th) * th

    if Mp != M:
        x2 = jnp.pad(x2, ((0, Mp - M), (0, 0)))
    if Hp != H:
        w1b = jnp.pad(w1b, ((0, 0), (0, Hp - H)))
        w3b = jnp.pad(w3b, ((0, 0), (0, Hp - H)))
        w2b = jnp.pad(w2b, ((0, Hp - H), (0, 0)))

    grid = (Mp // tm, Hp // th)

    ws = _working_set_bytes(tm, th, D, out_itemsize, not direct)
    vmem_limit = int(min(capacity - 4 * _MIB,
                         max(int(capacity * 0.78), ws + 8 * _MIB)))
    vmem_limit = max(vmem_limit, 32 * _MIB)

    kernel = _ffn_kernel_direct if direct else _ffn_kernel_scratch
    scratch = [] if direct else [pltpu.VMEM((tm, D), jnp.float32)]

    out = pl.pallas_call(
        kernel,
        out_shape=jax.ShapeDtypeStruct((Mp, D), out_dtype),
        grid_spec=pltpu.PrefetchScalarGridSpec(
            num_scalar_prefetch=0,
            grid=grid,
            in_specs=[
                pl.BlockSpec((tm, D), lambda i, j: (i, 0)),   # x rows (j-invariant)
                pl.BlockSpec((D, th), lambda i, j: (0, j)),   # fc1 weight slice
                pl.BlockSpec((D, th), lambda i, j: (0, j)),   # fc3 (gate) weight slice
                pl.BlockSpec((th, D), lambda i, j: (j, 0)),   # fc2 weight slice
            ],
            out_specs=pl.BlockSpec((tm, D), lambda i, j: (i, 0)),
            scratch_shapes=scratch,
        ),
        compiler_params=pltpu.CompilerParams(
            dimension_semantics=("parallel", "arbitrary"),
            vmem_limit_bytes=vmem_limit,
        ),
    )(x2, w1b, w3b, w2b)

    out = out[:M] if Mp != M else out
    return out.reshape(*lead, D) if lead else out.reshape(D)


def ffn_reference(x, w1, w2, w3):
    """Pure-JAX reference with identical bf16/f32 casting."""
    bf16, f32 = jnp.bfloat16, jnp.float32
    xb = x.astype(bf16)
    h1 = jnp.dot(xb, w1.astype(bf16), preferred_element_type=f32)
    h3 = jnp.dot(xb, w3.astype(bf16), preferred_element_type=f32)
    gated = (jax.nn.silu(h1) * h3).astype(bf16)
    return jnp.dot(gated, w2.astype(bf16), preferred_element_type=f32).astype(x.dtype)


if __name__ == "__main__":
    # --- small config consistent with the module: batch=2, seq=8, d_model=32 ---
    B, S, D = 2, 8, 32
    H = 4 * D
    scale = 0.05

    key = jax.random.PRNGKey(0)
    kx, k1, k2, k3 = jax.random.split(key, 4)
    x = jax.random.normal(kx, (B, S, D), jnp.float32)
    # Weights stored as (in_features, out_features) == transposed nn.Linear layout.
    w1 = scale * jax.random.normal(k1, (D, H), jnp.float32)   # fc1
    w2 = scale * jax.random.normal(k2, (H, D), jnp.float32)   # fc2
    w3 = scale * jax.random.normal(k3, (D, H), jnp.float32)   # fc3 (SwiGLU gate)

    out = jax.block_until_ready(ffn(x, w1, w2, w3))
    ref = ffn_reference(x, w1, w2, w3)
    assert out.shape == (B, S, D)
    assert jnp.allclose(out, ref, atol=1e-3, rtol=1e-3), \
        float(jnp.max(jnp.abs(out - ref)))

    # --- larger config: multi-tile grid, streamed hidden axis, and a
    #     non-divisible M (120 rows, tm=64 -> padded to 128) ---
    B2, S2, D2 = 3, 40, 256
    H2 = 4 * D2
    kx2, ka, kb, kc = jax.random.split(jax.random.PRNGKey(0), 4)
    x_l = jax.random.normal(kx2, (B2, S2, D2), jnp.float32)
    w1_l = scale * jax.random.normal(ka, (D2, H2), jnp.float32)
    w2_l = scale * jax.random.normal(kb, (H2, D2), jnp.float32)
    w3_l = scale * jax.random.normal(kc, (D2, H2), jnp.float32)

    out_l = jax.block_until_ready(ffn(x_l, w1_l, w2_l, w3_l, tm=64, th=256))
    ref_l = ffn_reference(x_l, w1_l, w2_l, w3_l)
    assert out_l.shape == (B2, S2, D2)
    assert jnp.allclose(out_l, ref_l, atol=1e-3, rtol=1e-3), \
        float(jnp.max(jnp.abs(out_l - ref_l)))

    # --- bf16 activations exercise the f32-scratch finalize path ---
    x_bf = x.astype(jnp.bfloat16)
    out_bf = jax.block_until_ready(ffn(x_bf, w1, w2, w3))
    ref_bf = ffn_reference(x_bf, w1, w2, w3)
    assert out_bf.dtype == jnp.bfloat16
    assert jnp.allclose(out_bf.astype(jnp.float32), ref_bf.astype(jnp.float32),
                        atol=1e-2, rtol=1e-2)

    print("KERNEL_OK")
</pallas_src>

<mosaic_0001>
module attributes {stable_mosaic.version = 11 : i64} {
  func.func @_ffn_kernel_direct(%arg0: i32, %arg1: i32, %arg2: memref<16x32xbf16, #tpu.memory_space<vmem>>, %arg3: memref<32x128xbf16, #tpu.memory_space<vmem>>, %arg4: memref<32x128xbf16, #tpu.memory_space<vmem>>, %arg5: memref<128x32xbf16, #tpu.memory_space<vmem>>, %arg6: memref<16x32xf32, #tpu.memory_space<vmem>>) attributes {dimension_semantics = [#tpu.dimension_semantics<parallel>, #tpu.dimension_semantics<arbitrary>], iteration_bounds = array<i64: 1, 1>, scalar_prefetch = 0 : i64, scratch_operands = 0 : i64, tpu.core_type = #tpu.core_type<tc>, window_params = [{transform_indices = @transform_0, window_bounds = array<i64: 16, 32>}, {transform_indices = @transform_1, window_bounds = array<i64: 32, 128>}, {transform_indices = @transform_2, window_bounds = array<i64: 32, 128>}, {transform_indices = @transform_3, window_bounds = array<i64: 128, 32>}, {transform_indices = @transform_4, window_bounds = array<i64: 16, 32>}]} {
    %c0_i32 = arith.constant 0 : i32
    %0 = arith.cmpi eq, %arg1, %c0_i32 : i32
    %1 = arith.extui %0 : i1 to i32
    %c0_i32_0 = arith.constant 0 : i32
    %2 = arith.cmpi ne, %1, %c0_i32_0 : i32
    scf.if %2 {
      %cst_15 = arith.constant 0.000000e+00 : f32
      %21 = vector.broadcast %cst_15 : f32 to vector<16x32xf32>
      %c0_16 = arith.constant 0 : index
      %c0_17 = arith.constant 0 : index
      %22 = vector.load %arg6[%c0_16, %c0_17] : memref<16x32xf32, #tpu.memory_space<vmem>>, vector<16x32xf32>
      tpu.vector_store %arg6[%c0_16, %c0_17], %21 {strides = array<i32>} : memref<16x32xf32, #tpu.memory_space<vmem>>, vector<16x32xf32>,
    } else {
    }
    %c0 = arith.constant 0 : index
    %c0_1 = arith.constant 0 : index
    %3 = vector.load %arg2[%c0, %c0_1] : memref<16x32xbf16, #tpu.memory_space<vmem>>, vector<16x32xbf16>
    %c0_2 = arith.constant 0 : index
    %c0_3 = arith.constant 0 : index
    %4 = vector.load %arg3[%c0_2, %c0_3] : memref<32x128xbf16, #tpu.memory_space<vmem>>, vector<32x128xbf16>
    %cst = arith.constant dense<0.000000e+00> : vector<16x128xf32>
    %5 = tpu.matmul %3, %4, %cst {dimension_numbers = #tpu.dot_dimension_numbers<[1], [0], [0], [1], [0, 0, 1, 1], [], []>} : vector<16x32xbf16>, vector<32x128xbf16>, vector<16x128xf32> -> vector<16x128xf32>
    %c0_4 = arith.constant 0 : index
    %c0_5 = arith.constant 0 : index
    %6 = vector.load %arg4[%c0_4, %c0_5] : memref<32x128xbf16, #tpu.memory_space<vmem>>, vector<32x128xbf16>
    %cst_6 = arith.constant dense<0.000000e+00> : vector<16x128xf32>
    %7 = tpu.matmul %3, %6, %cst_6 {dimension_numbers = #tpu.dot_dimension_numbers<[1], [0], [0], [1], [0, 0, 1, 1], [], []>} : vector<16x32xbf16>, vector<32x128xbf16>, vector<16x128xf32> -> vector<16x128xf32>
    %8 = arith.negf %5 : vector<16x128xf32>
    %9 = math.exp %8 : vector<16x128xf32>
    %cst_7 = arith.constant 1.000000e+00 : f32
    %10 = vector.broadcast %cst_7 : f32 to vector<16x128xf32>
    %11 = arith.addf %10, %9 : vector<16x128xf32>
    %12 = arith.divf %10, %11 : vector<16x128xf32>
    %13 = arith.mulf %5, %12 : vector<16x128xf32>
    %14 = arith.mulf %13, %7 : vector<16x128xf32>
    %15 = arith.truncf %14 : vector<16x128xf32> to vector<16x128xbf16>
    %c0_8 = arith.constant 0 : index
    %c0_9 = arith.constant 0 : index
    %16 = vector.load %arg6[%c0_8, %c0_9] : memref<16x32xf32, #tpu.memory_space<vmem>>, vector<16x32xf32>
    %c0_10 = arith.constant 0 : index
    %c0_11 = arith.constant 0 : index
    %17 = vector.load %arg5[%c0_10, %c0_11] : memref<128x32xbf16, #tpu.memory_space<vmem>>, vector<128x32xbf16>
    %cst_12 = arith.constant dense<0.000000e+00> : vector<16x32xf32>
    %18 = tpu.matmul %15, %17, %cst_12 {dimension_numbers = #tpu.dot_dimension_numbers<[1], [0], [0], [1], [0, 0, 1, 1], [], []>} : vector<16x128xbf16>, vector<128x32xbf16>, vector<16x32xf32> -> vector<16x32xf32>
    %19 = arith.addf %16, %18 : vector<16x32xf32>
    %c0_13 = arith.constant 0 : index
    %c0_14 = arith.constant 0 : index
    %20 = vector.load %arg6[%c0_13, %c0_14] : memref<16x32xf32, #tpu.memory_space<vmem>>, vector<16x32xf32>
    tpu.vector_store %arg6[%c0_13, %c0_14], %19 {strides = array<i32>} : memref<16x32xf32, #tpu.memory_space<vmem>>, vector<16x32xf32>,
    return
  }
  func.func @transform_0(%arg0: i32, %arg1: i32) -> (i32, i32) {
    %c0_i32 = arith.constant 0 : i32
    %c0_i32_0 = arith.constant 0 : i32
    return %arg0, %c0_i32 : i32, i32
  }
  func.func @transform_1(%arg0: i32, %arg1: i32) -> (i32, i32) {
    %c0_i32 = arith.constant 0 : i32
    %c0_i32_0 = arith.constant 0 : i32
    return %c0_i32, %arg1 : i32, i32
  }
  func.func @transform_2(%arg0: i32, %arg1: i32) -> (i32, i32) {
    %c0_i32 = arith.constant 0 : i32
    %c0_i32_0 = arith.constant 0 : i32
    return %c0_i32, %arg1 : i32, i32
  }
  func.func @transform_3(%arg0: i32, %arg1: i32) -> (i32, i32) {
    %c0_i32 = arith.constant 0 : i32
    %c0_i32_0 = arith.constant 0 : i32
    return %arg1, %c0_i32 : i32, i32
  }
  func.func @transform_4(%arg0: i32, %arg1: i32) -> (i32, i32) {
    %c0_i32 = arith.constant 0 : i32
    %c0_i32_0 = arith.constant 0 : i32
    return %arg0, %c0_i32 : i32, i32
  }
}

</mosaic_0001>

<llo_original>
// kernel: tpu_custom_call.1
$region0: #{tpu_custom_call.1}
  #allocation0 [shape = 'u32[]', space=smem, size = 0x4, offset = 0x4, fixed_abs, tag = 'smem constant byte address 0x4 - core index']
  #allocation1 [shape = 'u32[144,128]{1,0:T(1,128)}', space=vmem, size = 0x12000, scoped, tag = 'internal scratch']
  %s0 = inlined_call_operand.vmem [shape: bf16[16,32], index: 0, kind: input, shape index: {}]
  %s1 = inlined_call_operand.vmem [shape: bf16[32,128], index: 1, kind: input, shape index: {}]
  %s2 = inlined_call_operand.vmem [shape: bf16[32,128], index: 2, kind: input, shape index: {}]
  %s3 = inlined_call_operand.vmem [shape: bf16[128,32], index: 3, kind: input, shape index: {}]
  %s4 = inlined_call_operand.hbm [shape: f32[16,32], index: 4, kind: output, shape index: {}]
  %s5 = sld [smem:[#allocation0]]
  $region30: #{tpu_custom_call.1} parent=0
    _
  %s7 = ssub.s32 1, %s5
  %s8 = scalar_select 0, %s7, %s5
  $region1: #{tpu_custom_call.1} parent=0
    #allocation2 [shape = 'u8[8192]{0}', space=vmem, size = 0x2000, scoped, tag = 'output window, operand 0, single buffered']
    #allocation3 [shape = 's32[1]{0}', space=sflag, size = 0x4, scoped, tag = 'scoped memory for tpu_custom_call.1']
    %9 = vsyncpa [#allocation3], 0
    // Predicated region
    $region2: #{tpu_custom_call.1} parent=1 // pred_check
      _
    $region3: #{tpu_custom_call.1} parent=1 // pred_check_branch
      %11 = sbr.rel (0) target = $region5
    $region4: #{tpu_custom_call.1} parent=1 // pred_region
      _
    $region5: #{tpu_custom_call.1} parent=1 // pred_fallthru
      _
    // Predicated region
    $region6: #{tpu_custom_call.1} parent=1 // pred_check
      _
    $region7: #{tpu_custom_call.1} parent=1 // pred_check_branch
      %13 = sbr.rel (0) target = $region9
    $region8: #{tpu_custom_call.1} parent=1 // pred_region
      _
    $region9: #{tpu_custom_call.1} parent=1 // pred_fallthru
      _
    // Predicated region
    $region10: #{tpu_custom_call.1} parent=1 // pred_check
      _
    $region11: #{tpu_custom_call.1} parent=1 // pred_check_branch
      %15 = sbr.rel (0) target = $region13
    $region12: #{tpu_custom_call.1} parent=1 // pred_region
      _
    $region13: #{tpu_custom_call.1} parent=1 // pred_fallthru
      _
    // Predicated region
    $region14: #{tpu_custom_call.1} parent=1 // pred_check
      _
    $region15: #{tpu_custom_call.1} parent=1 // pred_check_branch
      %17 = sbr.rel (0) target = $region17
    $region16: #{tpu_custom_call.1} parent=1 // pred_region
      _
    $region17: #{tpu_custom_call.1} parent=1 // pred_fallthru
      _
    %p19 = scmp.eq.s32.totalorder 0, 0
    // Predicated region
    $region18: #{tpu_custom_call.1} parent=1 // pred_check
      %p20 = pneg %p19
    $region19: #{tpu_custom_call.1} parent=1 // pred_check_branch
      %22 = sbr.rel (%p20) target = $region21
    $region20: #{tpu_custom_call.1} parent=1 // pred_region
      %vm23 = vcmask 261120
      %24 = vst.msk [vmem:[#allocation2] sm:$0xff] %vm23, 0.0
      %25 = vst.msk [vmem:[#allocation2 + $0x8] sm:$0xff] %vm23, 0.0
    $region21: #{tpu_custom_call.1} parent=1 // pred_fallthru
      _
    %v26 = vld [vmem:[%s0] sm:$0xf]
    %v27 = vld [vmem:[%s0 + $0x4] sm:$0xf]
    %v28 = vld [vmem:[%s1] sm:$0xf]
    %v29 = vld [vmem:[%s1 + $0x4] sm:$0xf]
    %v30 = vld [vmem:[%s1 + $0x8] sm:$0xf]
    %v31 = vld [vmem:[%s1 + $0xc] sm:$0xf]
    %v34 = vunpack.c.l.b16 %v26
    %v35 = vunpack.c.l.b16 %v27
    %v36 = vpack.c.b16 %v35, %v34
    %v41 = vunpack.c.l.b16 %v28
    %v42 = vunpack.c.l.b16 %v29
    %v43 = vunpack.c.l.b16 %v30
    %v44 = vunpack.c.l.b16 %v31
    %v45 = vpack.c.b16 %v42, %v41
    %v46 = vpack.c.b16 %v44, %v43
    %vm49 = vcmask 261120
    %v51 = vsel %vm49, %v36, 0
    %53 = vmatprep.subr.bf16.mxu0 0
    %54 = vmatpush1.bf16.msra.mxu0 %v45
    %55 = vmatprep.subr.bf16.mxu0 0
    %56 = vmatpush1.bf16.msra.mxu0 %v46
    %57 = vmatprep.subr.bf16.mxu0 0
    %58 = vmatpush1.bf16.msra.mxu0 0
    %59 = vmatprep.subr.bf16.mxu0 0
    %60 = vmatpush1.bf16.msra.mxu0 0
    %61 = vmatprep.subr.bf16.mxu0 0
    %62 = vmatpush1.bf16.msra.mxu0 0
    %63 = vmatprep.subr.bf16.mxu0 0
    %64 = vmatpush1.bf16.msra.mxu0 0
    %65 = vmatprep.subr.bf16.mxu0 0
    %66 = vmatpush1.bf16.msra.mxu0 0
    %67 = vmatprep.subr.bf16.mxu0 0
    %68 = vmatpush1.bf16.msra.mxu0 0
    %69 = vmatprep.subr.bf16.mxu0 0
    %70 = vmatpush1.bf16.msra.mxu0 0
    %71 = vmatprep.subr.bf16.mxu0 0
    %72 = vmatpush1.bf16.msra.mxu0 0
    %73 = vmatprep.subr.bf16.mxu0 0
    %74 = vmatpush1.bf16.msra.mxu0 0
    %75 = vmatprep.subr.bf16.mxu0 0
    %76 = vmatpush1.bf16.msra.mxu0 0
    %77 = vmatprep.subr.bf16.mxu0 0
    %78 = vmatpush1.bf16.msra.mxu0 0
    %79 = vmatprep.subr.bf16.mxu0 0
    %80 = vmatpush1.bf16.msra.mxu0 0
    %81 = vmatprep.subr.bf16.mxu0 0
    %82 = vmatpush1.bf16.msra.mxu0 0
    %83 = vmatprep.subr.bf16.mxu0 0
    %84 = vmatpush1.bf16.msra.mxu0 0
    %85 = vmatprep.mubr.bf16.mxu0 0
    %86 = vmatmul.mubr.bf16.gmra.mrb[0].mxu0 %v51
    %v87 = vpop.f32.mrb[0].mxu0
    %v88 = vadd.f32 0.0, %v87
    %v89 = vpop.f32.mrb[0].mxu0
    %v90 = vpop.f32.mrb[0].mxu0
    %v91 = vadd.f32 0.0, %v90
    %v92 = vpop.f32.mrb[0].mxu0
    %93 = vdwg.mxu0
    %v94 = vld [vmem:[%s2] sm:$0xf]
    %v95 = vld [vmem:[%s2 + $0x4] sm:$0xf]
    %v96 = vld [vmem:[%s2 + $0x8] sm:$0xf]
    %v97 = vld [vmem:[%s2 + $0xc] sm:$0xf]
    %v102 = vunpack.c.l.b16 %v94
    %v103 = vunpack.c.l.b16 %v95
    %v104 = vunpack.c.l.b16 %v96
    %v105 = vunpack.c.l.b16 %v97
    %v106 = vpack.c.b16 %v103, %v102
    %v107 = vpack.c.b16 %v105, %v104
    %110 = vmatprep.subr.bf16.mxu0 0
    %111 = vmatpush1.bf16.msra.mxu0 %v106
    %112 = vmatprep.subr.bf16.mxu0 0
    %113 = vmatpush1.bf16.msra.mxu0 %v107
    %114 = vmatprep.subr.bf16.mxu0 0
    %115 = vmatpush1.bf16.msra.mxu0 0
    %116 = vmatprep.subr.bf16.mxu0 0
    %117 = vmatpush1.bf16.msra.mxu0 0
    %118 = vmatprep.subr.bf16.mxu0 0
    %119 = vmatpush1.bf16.msra.mxu0 0
    %120 = vmatprep.subr.bf16.mxu0 0
    %121 = vmatpush1.bf16.msra.mxu0 0
    %122 = vmatprep.subr.bf16.mxu0 0
    %123 = vmatpush1.bf16.msra.mxu0 0
    %124 = vmatprep.subr.bf16.mxu0 0
    %125 = vmatpush1.bf16.msra.mxu0 0
    %126 = vmatprep.subr.bf16.mxu0 0
    %127 = vmatpush1.bf16.msra.mxu0 0
    %128 = vmatprep.subr.bf16.mxu0 0
    %129 = vmatpush1.bf16.msra.mxu0 0
    %130 = vmatprep.subr.bf16.mxu0 0
    %131 = vmatpush1.bf16.msra.mxu0 0
    %132 = vmatprep.subr.bf16.mxu0 0
    %133 = vmatpush1.bf16.msra.mxu0 0
    %134 = vmatprep.subr.bf16.mxu0 0
    %135 = vmatpush1.bf16.msra.mxu0 0
    %136 = vmatprep.subr.bf16.mxu0 0
    %137 = vmatpush1.bf16.msra.mxu0 0
    %138 = vmatprep.subr.bf16.mxu0 0
    %139 = vmatpush1.bf16.msra.mxu0 0
    %140 = vmatprep.subr.bf16.mxu0 0
    %141 = vmatpush1.bf16.msra.mxu0 0
    %142 = vmatprep.mubr.bf16.mxu0 0
    %143 = vmatmul.mubr.bf16.gmra.mrb[0].mxu0 %v51
    %v144 = vpop.f32.mrb[0].mxu0
    %v145 = vadd.f32 0.0, %v144
    %v146 = vpop.f32.mrb[0].mxu0
    %v147 = vpop.f32.mrb[0].mxu0
    %v148 = vadd.f32 0.0, %v147
    %v149 = vpop.f32.mrb[0].mxu0
    %150 = vdwg.mxu0
    %v151 = vxor.u32 %v88, 2147483648
    %v152 = vxor.u32 %v91, 2147483648
    %v153 = vmul.f32 %v151, 1.442695
    %v154 = vpow.pop %v153
    %v155 = vmul.f32 %v152, 1.442695
    %v156 = vpow.pop %v155
    %v157 = vadd.f32 %v154, 1.0
    %v158 = vadd.f32 %v156, 1.0
    %v159 = vrcp.pop %v157
    %v160 = vmul.f32 1.0, %v159
    %v161 = vrcp.pop %v158
    %v162 = vmul.f32 1.0, %v161
    %v163 = vmul.f32 %v88, %v160
    %v164 = vmul.f32 %v91, %v162
    %v165 = vmul.f32 %v163, %v145
    %v166 = vmul.f32 %v164, %v148
    %v167 = vpack.c.bf16 %v166, %v165
    %v168 = vld [vmem:[#allocation2] sm:$0xff]
    %v169 = vld [vmem:[#allocation2 + $0x8] sm:$0xff]
    %v170 = vld [vmem:[%s3] sm:$0xf]
    %v171 = vld [vmem:[%s3 + $0x4] sm:$0xf]
    %v172 = vld [vmem:[%s3 + $0x8] sm:$0xf]
    %v173 = vld [vmem:[%s3 + $0xc] sm:$0xf]
    %v174 = vld [vmem:[%s3 + $0x10] sm:$0xf]
    %v175 = vld [vmem:[%s3 + $0x14] sm:$0xf]
    %v176 = vld [vmem:[%s3 + $0x18] sm:$0xf]
    %v177 = vld [vmem:[%s3 + $0x1c] sm:$0xf]
    %v178 = vld [vmem:[%s3 + $0x20] sm:$0xf]
    %v179 = vld [vmem:[%s3 + $0x24] sm:$0xf]
    %v180 = vld [vmem:[%s3 + $0x28] sm:$0xf]
    %v181 = vld [vmem:[%s3 + $0x2c] sm:$0xf]
    %v182 = vld [vmem:[%s3 + $0x30] sm:$0xf]
    %v183 = vld [vmem:[%s3 + $0x34] sm:$0xf]
    %v184 = vld [vmem:[%s3 + $0x38] sm:$0xf]
    %v185 = vld [vmem:[%s3 + $0x3c] sm:$0xf]
    %v202 = vunpack.c.l.b16 %v170
    %v203 = vunpack.c.l.b16 %v171
    %v204 = vunpack.c.l.b16 %v172
    %v205 = vunpack.c.l.b16 %v173
    %v206 = vunpack.c.l.b16 %v174
    %v207 = vunpack.c.l.b16 %v175
    %v208 = vunpack.c.l.b16 %v176
    %v209 = vunpack.c.l.b16 %v177
    %v210 = vunpack.c.l.b16 %v178
    %v211 = vunpack.c.l.b16 %v179
    %v212 = vunpack.c.l.b16 %v180
    %v213 = vunpack.c.l.b16 %v181
    %v214 = vunpack.c.l.b16 %v182
    %v215 = vunpack.c.l.b16 %v183
    %v216 = vunpack.c.l.b16 %v184
    %v217 = vunpack.c.l.b16 %v185
    %v218 = vpack.c.b16 %v203, %v202
    %v219 = vpack.c.b16 %v205, %v204
    %v220 = vpack.c.b16 %v207, %v206
    %v221 = vpack.c.b16 %v209, %v208
    %v222 = vpack.c.b16 %v211, %v210
    %v223 = vpack.c.b16 %v213, %v212
    %v224 = vpack.c.b16 %v215, %v214
    %v225 = vpack.c.b16 %v217, %v216
    %234 = vmatprep.subr.bf16.mxu0 0
    %235 = vmatpush1.bf16.msra.mxu0 %v218
    %236 = vmatprep.subr.bf16.mxu0 0
    %237 = vmatpush1.bf16.msra.mxu0 %v219
    %238 = vmatprep.subr.bf16.mxu0 0
    %239 = vmatpush1.bf16.msra.mxu0 %v220
    %240 = vmatprep.subr.bf16.mxu0 0
    %241 = vmatpush1.bf16.msra.mxu0 %v221
    %242 = vmatprep.subr.bf16.mxu0 0
    %243 = vmatpush1.bf16.msra.mxu0 %v222
    %244 = vmatprep.subr.bf16.mxu0 0
    %245 = vmatpush1.bf16.msra.mxu0 %v223
    %246 = vmatprep.subr.bf16.mxu0 0
    %247 = vmatpush1.bf16.msra.mxu0 %v224
    %248 = vmatprep.subr.bf16.mxu0 0
    %249 = vmatpush1.bf16.msra.mxu0 %v225
    %250 = vmatprep.subr.bf16.mxu0 0
    %251 = vmatpush1.bf16.msra.mxu0 0
    %252 = vmatprep.subr.bf16.mxu0 0
    %253 = vmatpush1.bf16.msra.mxu0 0
    %254 = vmatprep.subr.bf16.mxu0 0
    %255 = vmatpush1.bf16.msra.mxu0 0
    %256 = vmatprep.subr.bf16.mxu0 0
    %257 = vmatpush1.bf16.msra.mxu0 0
    %258 = vmatprep.subr.bf16.mxu0 0
    %259 = vmatpush1.bf16.msra.mxu0 0
    %260 = vmatprep.subr.bf16.mxu0 0
    %261 = vmatpush1.bf16.msra.mxu0 0
    %262 = vmatprep.subr.bf16.mxu0 0
    %263 = vmatpush1.bf16.msra.mxu0 0
    %264 = vmatprep.subr.bf16.mxu0 0
    %265 = vmatpush1.bf16.msra.mxu0 0
    %266 = vmatprep.mubr.bf16.mxu0 0
    %267 = vmatmul.mubr.bf16.gmra.mrb[0].mxu0 %v167
    %v268 = vpop.f32.mrb[0].mxu0
    %v269 = vadd.f32 0.0, %v268
    %v270 = vpop.f32.mrb[0].mxu0
    %v271 = vpop.f32.mrb[0].mxu0
    %v272 = vadd.f32 0.0, %v271
    %v273 = vpop.f32.mrb[0].mxu0
    %274 = vdwg.mxu0
    %v275 = vadd.f32 %v168, %v269
    %v276 = vadd.f32 %v169, %v272
    %277 = vst.msk [vmem:[#allocation2] sm:$0xff] %vm49, %v275
    %278 = vst.msk [vmem:[#allocation2 + $0x8] sm:$0xff] %vm49, %v276
    // Predicated region
    $region22: #{tpu_custom_call.1} parent=1 // pred_check
      _
    $region23: #{tpu_custom_call.1} parent=1 // pred_check_branch
      %280 = sbr.rel (0) target = $region25
    $region24: #{tpu_custom_call.1} parent=1 // pred_region
      %s282 = ssub.s32 256, 256
      %283 = vsyncadd [#allocation3], %s282
      %s284 = sshll.u32 [#allocation2], 4
      %s285 = int_to_ptr.vmem [resolvable:$true] %s284
      %290 = dma.vmem_to_hbm [thread:$0]  %s285, 256, %s4, [#allocation3], 128, 128, 8
    $region25: #{tpu_custom_call.1} parent=1 // pred_fallthru
      _
    // Predicated region
    $region26: #{tpu_custom_call.1} parent=1 // pred_check
      _
    $region27: #{tpu_custom_call.1} parent=1 // pred_check_branch
      %292 = sbr.rel (0) target = $region29
    $region28: #{tpu_custom_call.1} parent=1 // pred_region
      %293 = dma.done [#allocation3], 256
    $region29: #{tpu_custom_call.1} parent=1 // pred_fallthru
      _
    %294 = vsyncpa [#allocation3], 1

</llo_original>
